<compile_context>
chip_gen: v7x
topology: tpu7x:2x2x1
jax: 0.10.0
libtpu: 0.0.40
codegen_flags: <defaults>
</compile_context>

<pallas_src>
import functools

import jax
import jax.numpy as jnp
from jax.experimental import pallas as pl
from jax.experimental.pallas import tpu as pltpu


def rnn_simple_kernel(x_ref, wi_ref, wh_ref, b_ref, y0_ref, y1_ref):
    """x_ref is [X0_padded; X1_padded] stacked along rows: (2*Bp, K)."""
    bp = y0_ref.shape[0]  # padded batch (multiple of 8 -> sublane-aligned split)

    # One fused MXU call for both time-step input projections, bias added once.
    pre = (
        jnp.dot(x_ref[...], wi_ref[...], preferred_element_type=jnp.float32)
        + b_ref[...]
    )  # (2*Bp, Npad)

    # Time step 0: Y0 = tanh(X0 @ W_in + b)
    y0 = jnp.tanh(pre[:bp])  # (Bp, Npad)

    # Time step 1: Y1 = tanh(Y0 @ W_h + (X1 @ W_in + b))
    y1 = jnp.tanh(
        jnp.dot(y0, wh_ref[...], preferred_element_type=jnp.float32) + pre[bp:]
    )  # (Bp, Npad)

    # Lane-dense (Npad = 128), sublane-aligned, unmasked full-width stores.
    y0_ref[...] = y0.astype(y0_ref.dtype)
    y1_ref[...] = y1.astype(y1_ref.dtype)


def pad_rnn_params(w_in, w_h, bias, *, lane=128):
    """One-time parameter prep: zero-pad the neuron (lane) dim to 128.

    Zero padding of W_in columns, W_h rows/cols and bias guarantees padded
    pre-activation columns are exactly 0 (tanh(0)=0), so padding cannot leak
    into real columns through W_h. Call this once at init, not per forward.
    """
    num_neurons = w_in.shape[1]
    n_pad = pl.cdiv(num_neurons, lane) * lane
    pad_n = n_pad - num_neurons
    bias2d = bias.reshape(1, -1)  # robust to 1-D bias
    wi_p = jnp.pad(w_in, ((0, 0), (0, pad_n)))
    wh_p = jnp.pad(w_h, ((0, pad_n), (0, pad_n)))
    b_p = jnp.pad(bias2d, ((0, 0), (0, pad_n)))
    return wi_p, wh_p, b_p, num_neurons


def rnn_simple_forward(x0, x1, wi_p, wh_p, b_p, *, num_neurons, sublane=8):
    """Forward for one (X0, X1) pair. Expects pre-padded params (pad_rnn_params).

    Single grid point, everything VMEM-resident (shapes are tiny). The wrapper
    stacks the two time steps and sublane-pads the batch so the kernel body is
    all aligned, unmasked accesses.
    """
    batch, in_features = x0.shape
    n_pad = wi_p.shape[1]
    b_pad = pl.cdiv(batch, sublane) * sublane
    pad_b = b_pad - batch

    # Wrapper-side stacking (fused by XLA): one (2*Bp, K) operand, one DMA.
    x_stacked = jnp.concatenate(
        [jnp.pad(x0, ((0, pad_b), (0, 0))), jnp.pad(x1, ((0, pad_b), (0, 0)))],
        axis=0,
    )

    # Advisory cost so XLA can schedule/overlap this tiny custom call.
    flops = 2 * (2 * b_pad * in_features * n_pad + b_pad * n_pad * n_pad)
    bytes_accessed = 4 * (
        x_stacked.size + wi_p.size + wh_p.size + b_p.size + 2 * b_pad * n_pad
    )
    cost = pl.CostEstimate(
        flops=flops,
        transcendentals=2 * b_pad * n_pad,
        bytes_accessed=bytes_accessed,
    )

    vmem_spec = pl.BlockSpec(memory_space=pltpu.VMEM)
    y0_p, y1_p = pl.pallas_call(
        rnn_simple_kernel,
        out_shape=(
            jax.ShapeDtypeStruct((b_pad, n_pad), x0.dtype),
            jax.ShapeDtypeStruct((b_pad, n_pad), x0.dtype),
        ),
        in_specs=[vmem_spec] * 4,
        out_specs=(vmem_spec, vmem_spec),
        cost_estimate=cost,
    )(x_stacked, wi_p, wh_p, b_p)

    # Only the cheap lane/row slice back to the logical shape remains.
    return y0_p[:batch, :num_neurons], y1_p[:batch, :num_neurons]


if __name__ == "__main__":
    # Small shapes consistent with the module: batch=8, inputFeatures=16, numNeurons=32.
    batch, input_features, num_neurons = 8, 16, 32

    key = jax.random.PRNGKey(0)
    k_x0, k_x1, k_wi, k_wh = jax.random.split(key, 4)

    x0 = jax.random.normal(k_x0, (batch, input_features), dtype=jnp.float32)
    x1 = jax.random.normal(k_x1, (batch, input_features), dtype=jnp.float32)

    # Parameter shapes match torch.randn / torch.zeros in the module.
    w_in = jax.random.normal(k_wi, (input_features, num_neurons), dtype=jnp.float32)
    w_h = jax.random.normal(k_wh, (num_neurons, num_neurons), dtype=jnp.float32)
    bias = jnp.zeros((1, num_neurons), dtype=jnp.float32)

    # One-time padded-parameter prep (outside the hot path).
    wi_p, wh_p, b_p, n_real = pad_rnn_params(w_in, w_h, bias)
    wi_p, wh_p, b_p = jax.block_until_ready((wi_p, wh_p, b_p))

    fwd = jax.jit(functools.partial(rnn_simple_forward, num_neurons=n_real))
    y0, y1 = fwd(x0, x1, wi_p, wh_p, b_p)
    jax.block_until_ready((y0, y1))

    # Pure-JAX reference check.
    y0_ref = jnp.tanh(x0 @ w_in + bias)
    y1_ref = jnp.tanh(y0_ref @ w_h + x1 @ w_in + bias)
    assert y0.shape == (batch, num_neurons) and y1.shape == (batch, num_neurons)
    assert jnp.allclose(y0, y0_ref, atol=1e-5), "Y0 mismatch"
    assert jnp.allclose(y1, y1_ref, atol=1e-5), "Y1 mismatch"

    print("KERNEL_OK")
</pallas_src>

<mosaic_0001>
module attributes {stable_mosaic.version = 11 : i64} {
  func.func @rnn_simple_kernel(%arg0: memref<16x16xf32, #tpu.memory_space<vmem>>, %arg1: memref<16x128xf32, #tpu.memory_space<vmem>>, %arg2: memref<128x128xf32, #tpu.memory_space<vmem>>, %arg3: memref<1x128xf32, #tpu.memory_space<vmem>>, %arg4: memref<8x128xf32, #tpu.memory_space<vmem>>, %arg5: memref<8x128xf32, #tpu.memory_space<vmem>>) attributes {dimension_semantics = [], scalar_prefetch = 0 : i64, scratch_operands = 0 : i64, tpu.core_type = #tpu.core_type<tc>} {
    %c0 = arith.constant 0 : index
    %c0_0 = arith.constant 0 : index
    %0 = vector.load %arg0[%c0, %c0_0] : memref<16x16xf32, #tpu.memory_space<vmem>>, vector<16x16xf32>
    %c0_1 = arith.constant 0 : index
    %c0_2 = arith.constant 0 : index
    %1 = vector.load %arg1[%c0_1, %c0_2] : memref<16x128xf32, #tpu.memory_space<vmem>>, vector<16x128xf32>
    %cst = arith.constant dense<0.000000e+00> : vector<16x128xf32>
    %2 = tpu.matmul %0, %1, %cst {dimension_numbers = #tpu.dot_dimension_numbers<[1], [0], [0], [1], [0, 0, 1, 1], [], []>} : vector<16x16xf32>, vector<16x128xf32>, vector<16x128xf32> -> vector<16x128xf32>
    %c0_3 = arith.constant 0 : index
    %c0_4 = arith.constant 0 : index
    %3 = vector.load %arg3[%c0_3, %c0_4] : memref<1x128xf32, #tpu.memory_space<vmem>>, vector<1x128xf32>
    %4 = vector.broadcast %3 : vector<1x128xf32> to vector<16x128xf32>
    %5 = arith.addf %2, %4 : vector<16x128xf32>
    %6 = vector.extract_strided_slice %5 {offsets = [0, 0], sizes = [8, 128], strides = [1, 1]} : vector<16x128xf32> to vector<8x128xf32>
    %7 = math.tanh %6 : vector<8x128xf32>
    %c0_5 = arith.constant 0 : index
    %c0_6 = arith.constant 0 : index
    %8 = vector.load %arg2[%c0_5, %c0_6] : memref<128x128xf32, #tpu.memory_space<vmem>>, vector<128x128xf32>
    %cst_7 = arith.constant dense<0.000000e+00> : vector<8x128xf32>
    %9 = tpu.matmul %7, %8, %cst_7 {dimension_numbers = #tpu.dot_dimension_numbers<[1], [0], [0], [1], [0, 0, 1, 1], [], []>} : vector<8x128xf32>, vector<128x128xf32>, vector<8x128xf32> -> vector<8x128xf32>
    %10 = vector.extract_strided_slice %5 {offsets = [8, 0], sizes = [8, 128], strides = [1, 1]} : vector<16x128xf32> to vector<8x128xf32>
    %11 = arith.addf %9, %10 : vector<8x128xf32>
    %12 = math.tanh %11 : vector<8x128xf32>
    %c0_8 = arith.constant 0 : index
    %c0_9 = arith.constant 0 : index
    %13 = vector.load %arg4[%c0_8, %c0_9] : memref<8x128xf32, #tpu.memory_space<vmem>>, vector<8x128xf32>
    tpu.vector_store %arg4[%c0_8, %c0_9], %7 {strides = array<i32>} : memref<8x128xf32, #tpu.memory_space<vmem>>, vector<8x128xf32>,
    %c0_10 = arith.constant 0 : index
    %c0_11 = arith.constant 0 : index
    %14 = vector.load %arg5[%c0_10, %c0_11] : memref<8x128xf32, #tpu.memory_space<vmem>>, vector<8x128xf32>
    tpu.vector_store %arg5[%c0_10, %c0_11], %12 {strides = array<i32>} : memref<8x128xf32, #tpu.memory_space<vmem>>, vector<8x128xf32>,
    return
  }
}

</mosaic_0001>

<llo_original>
// kernel: rnn_simple_forward.1
$region0: #{rnn_simple_forward.1}
  #allocation0 [shape = 'u32[]', space=smem, size = 0x4, offset = 0x4, fixed_abs, tag = 'smem constant byte address 0x4 - core index']
  #allocation1 [shape = 'u32[144,128]{1,0:T(1,128)}', space=vmem, size = 0x12000, scoped, tag = 'internal scratch']
  %s0 = inlined_call_operand.vmem [shape: f32[16,16], index: 0, kind: input, shape index: {}]
  %s1 = inlined_call_operand.vmem [shape: f32[16,128], index: 1, kind: input, shape index: {}]
  %s2 = inlined_call_operand.hbm [shape: f32[128,128], index: 2, kind: input, shape index: {}]
  %s3 = inlined_call_operand.vmem [shape: f32[1,128], index: 3, kind: input, shape index: {}]
  %s4 = inlined_call_operand.hbm [shape: f32[8,128], index: 4, kind: output, shape index: {0}]
  %s5 = inlined_call_operand.hbm [shape: f32[8,128], index: 5, kind: output, shape index: {1}]
  %6 = xla_tuple %s4, %s5
  %s7 = sld [smem:[#allocation0]]
  $region38: #{rnn_simple_forward.1} parent=0
    _
  %s9 = ssub.s32 1, %s7
  %s10 = scalar_select 0, %s9, %s7
  $region1: #{rnn_simple_forward.1} parent=0
    #allocation2 [shape = 'u8[65536]{0}', space=vmem, size = 0x10000, scoped, tag = 'input window, operand 2, single buffered']
    #allocation3 [shape = 's32[1]{0}', space=sflag, size = 0x4, scoped, tag = 'scoped memory for rnn_simple_forward.1']
    #allocation4 [shape = 's32[1]{0}', space=sflag, size = 0x4, scoped, tag = 'scoped memory for rnn_simple_forward.1']
    #allocation5 [shape = 'u8[4096]{0}', space=vmem, size = 0x1000, scoped, tag = 'output window, operand 0, single buffered']
    #allocation6 [shape = 'u8[4096]{0}', space=vmem, size = 0x1000, scoped, tag = 'output window, operand 1, single buffered']
    #allocation7 [shape = 's32[1]{0}', space=sflag, size = 0x4, scoped, tag = 'scoped memory for rnn_simple_forward.1']
    %11 = vsyncpa [#allocation3], 0
    %12 = vsyncpa [#allocation4], 0
    %13 = vsyncpa [#allocation7], 0
    // Predicated region
    $region2: #{rnn_simple_forward.1} parent=1 // pred_check
      _
    $region3: #{rnn_simple_forward.1} parent=1 // pred_check_branch
      %15 = sbr.rel (0) target = $region5
    $region4: #{rnn_simple_forward.1} parent=1 // pred_region
      _
    $region5: #{rnn_simple_forward.1} parent=1 // pred_fallthru
      _
    // Predicated region
    $region6: #{rnn_simple_forward.1} parent=1 // pred_check
      _
    $region7: #{rnn_simple_forward.1} parent=1 // pred_check_branch
      %17 = sbr.rel (0) target = $region9
    $region8: #{rnn_simple_forward.1} parent=1 // pred_region
      _
    $region9: #{rnn_simple_forward.1} parent=1 // pred_fallthru
      _
    // Predicated region
    $region10: #{rnn_simple_forward.1} parent=1 // pred_check
      _
    $region11: #{rnn_simple_forward.1} parent=1 // pred_check_branch
      %19 = sbr.rel (0) target = $region13
    $region12: #{rnn_simple_forward.1} parent=1 // pred_region
      %s21 = ssub.s32 2048, 2048
      %22 = vsyncadd [#allocation3], %s21
      %s23 = sshll.u32 [#allocation2], 4
      %s24 = int_to_ptr.vmem [resolvable:$true] %s23
      %29 = dma.hbm_to_vmem [thread:$0]  %s2, 2048, %s24, [#allocation3], 128, 128, 8
    $region13: #{rnn_simple_forward.1} parent=1 // pred_fallthru
      _
    // Predicated region
    $region14: #{rnn_simple_forward.1} parent=1 // pred_check
      _
    $region15: #{rnn_simple_forward.1} parent=1 // pred_check_branch
      %31 = sbr.rel (0) target = $region17
    $region16: #{rnn_simple_forward.1} parent=1 // pred_region
      _
    $region17: #{rnn_simple_forward.1} parent=1 // pred_fallthru
      _
    // Predicated region
    $region18: #{rnn_simple_forward.1} parent=1 // pred_check
      _
    $region19: #{rnn_simple_forward.1} parent=1 // pred_check_branch
      %33 = sbr.rel (0) target = $region21
    $region20: #{rnn_simple_forward.1} parent=1 // pred_region
      %34 = dma.done [#allocation3], 2048
    $region21: #{rnn_simple_forward.1} parent=1 // pred_fallthru
      _
    %v35 = vld [vmem:[%s0] sm:$0xff]
    %v36 = vld [vmem:[%s0 + $0x8] sm:$0xff]
    %v37 = vld [vmem:[%s1] sm:$0xff]
    %v38 = vld [vmem:[%s1 + $0x8] sm:$0xff]
    %v39 = vld [vmem:[%s3] sm:$0x1]
    %v41 = vlaneseq
    %v42 = vshrl.u32 %v41, 7
    %v43 = vsub.s32 0, %v42
    %v44 = vrot.slane %v39, %v43
    %vm46 = vcmask 130048
    %v48 = vsel %vm46, %v35, 0
    %v51 = vsel %vm46, %v36, 0
    %53 = vmatprep.subr.mxu0 0.0
    %54 = vmatpush1.msra.mxu0 %v37
    %55 = vmatprep.subr.mxu0 0.0
    %56 = vmatpush1.msra.mxu0 %v38
    %57 = vmatprep.subr.mxu0 0.0
    %58 = vmatpush1.msra.mxu0 0.0
    %59 = vmatprep.subr.mxu0 0.0
    %60 = vmatpush1.msra.mxu0 0.0
    %61 = vmatprep.subr.mxu0 0.0
    %62 = vmatpush1.msra.mxu0 0.0
    %63 = vmatprep.subr.mxu0 0.0
    %64 = vmatpush1.msra.mxu0 0.0
    %65 = vmatprep.subr.mxu0 0.0
    %66 = vmatpush1.msra.mxu0 0.0
    %67 = vmatprep.subr.mxu0 0.0
    %68 = vmatpush1.msra.mxu0 0.0
    %69 = vmatprep.subr.mxu0 0.0
    %70 = vmatpush1.msra.mxu0 0.0
    %71 = vmatprep.subr.mxu0 0.0
    %72 = vmatpush1.msra.mxu0 0.0
    %73 = vmatprep.subr.mxu0 0.0
    %74 = vmatpush1.msra.mxu0 0.0
    %75 = vmatprep.subr.mxu0 0.0
    %76 = vmatpush1.msra.mxu0 0.0
    %77 = vmatprep.subr.mxu0 0.0
    %78 = vmatpush1.msra.mxu0 0.0
    %79 = vmatprep.subr.mxu0 0.0
    %80 = vmatpush1.msra.mxu0 0.0
    %81 = vmatprep.subr.mxu0 0.0
    %82 = vmatpush1.msra.mxu0 0.0
    %83 = vmatprep.subr.mxu0 0.0
    %84 = vmatpush1.msra.mxu0 0.0
    %85 = vmatprep.subr.mxu0 0.0
    %86 = vmatpush1.msra.mxu0 0.0
    %87 = vmatprep.subr.mxu0 0.0
    %88 = vmatpush1.msra.mxu0 0.0
    %89 = vmatprep.subr.mxu0 0.0
    %90 = vmatpush1.msra.mxu0 0.0
    %91 = vmatprep.subr.mxu0 0.0
    %92 = vmatpush1.msra.mxu0 0.0
    %93 = vmatprep.subr.mxu0 0.0
    %94 = vmatpush1.msra.mxu0 0.0
    %95 = vmatprep.subr.mxu0 0.0
    %96 = vmatpush1.msra.mxu0 0.0
    %97 = vmatprep.subr.mxu0 0.0
    %98 = vmatpush1.msra.mxu0 0.0
    %99 = vmatprep.subr.mxu0 0.0
    %100 = vmatpush1.msra.mxu0 0.0
    %101 = vmatprep.subr.mxu0 0.0
    %102 = vmatpush1.msra.mxu0 0.0
    %103 = vmatprep.subr.mxu0 0.0
    %104 = vmatpush1.msra.mxu0 0.0
    %105 = vmatprep.subr.mxu0 0.0
    %106 = vmatpush1.msra.mxu0 0.0
    %107 = vmatprep.subr.mxu0 0.0
    %108 = vmatpush1.msra.mxu0 0.0
    %109 = vmatprep.subr.mxu0 0.0
    %110 = vmatpush1.msra.mxu0 0.0
    %111 = vmatprep.subr.mxu0 0.0
    %112 = vmatpush1.msra.mxu0 0.0
    %113 = vmatprep.subr.mxu0 0.0
    %114 = vmatpush1.msra.mxu0 0.0
    %115 = vmatprep.subr.mxu0 0.0
    %116 = vmatpush1.msra.mxu0 0.0
    %117 = vmatprep.mubr.f32.mxu0 0.0
    %118 = vmatmul.mubr.f32.gmra.mrb[0].mxu0 %v48
    %v119 = vpop.f32.mrb[0].mxu0
    %v120 = vadd.f32 %v44, %v119
    %v121 = vpop.f32.mrb[0].mxu0
    %122 = vmatprep.mubr.f32.mxu0 0.0
    %123 = vmatmul.mubr.f32.gmra.mrb[0].mxu0 %v51
    %v124 = vpop.f32.mrb[0].mxu0
    %v125 = vadd.f32 %v44, %v124
    %v126 = vpop.f32.mrb[0].mxu0
    %127 = vdwg.mxu0
    %v128 = vtanh.pop %v120
    %v129 = vld [vmem:[#allocation2] sm:$0xff]
    %v130 = vld [vmem:[#allocation2 + $0x8] sm:$0xff]
    %v131 = vld [vmem:[#allocation2 + $0x10] sm:$0xff]
    %v132 = vld [vmem:[#allocation2 + $0x18] sm:$0xff]
    %v133 = vld [vmem:[#allocation2 + $0x20] sm:$0xff]
    %v134 = vld [vmem:[#allocation2 + $0x28] sm:$0xff]
    %v135 = vld [vmem:[#allocation2 + $0x30] sm:$0xff]
    %v136 = vld [vmem:[#allocation2 + $0x38] sm:$0xff]
    %v137 = vld [vmem:[#allocation2 + $0x40] sm:$0xff]
    %v138 = vld [vmem:[#allocation2 + $0x48] sm:$0xff]
    %v139 = vld [vmem:[#allocation2 + $0x50] sm:$0xff]
    %v140 = vld [vmem:[#allocation2 + $0x58] sm:$0xff]
    %v141 = vld [vmem:[#allocation2 + $0x60] sm:$0xff]
    %v142 = vld [vmem:[#allocation2 + $0x68] sm:$0xff]
    %v143 = vld [vmem:[#allocation2 + $0x70] sm:$0xff]
    %v144 = vld [vmem:[#allocation2 + $0x78] sm:$0xff]
    %145 = vmatprep.subr.mxu0 0.0
    %146 = vmatpush1.msra.mxu0 %v129
    %147 = vmatprep.subr.mxu0 0.0
    %148 = vmatpush1.msra.mxu0 %v130
    %149 = vmatprep.subr.mxu0 0.0
    %150 = vmatpush1.msra.mxu0 %v131
    %151 = vmatprep.subr.mxu0 0.0
    %152 = vmatpush1.msra.mxu0 %v132
    %153 = vmatprep.subr.mxu0 0.0
    %154 = vmatpush1.msra.mxu0 %v133
    %155 = vmatprep.subr.mxu0 0.0
    %156 = vmatpush1.msra.mxu0 %v134
    %157 = vmatprep.subr.mxu0 0.0
    %158 = vmatpush1.msra.mxu0 %v135
    %159 = vmatprep.subr.mxu0 0.0
    %160 = vmatpush1.msra.mxu0 %v136
    %161 = vmatprep.subr.mxu0 0.0
    %162 = vmatpush1.msra.mxu0 %v137
    %163 = vmatprep.subr.mxu0 0.0
    %164 = vmatpush1.msra.mxu0 %v138
    %165 = vmatprep.subr.mxu0 0.0
    %166 = vmatpush1.msra.mxu0 %v139
    %167 = vmatprep.subr.mxu0 0.0
    %168 = vmatpush1.msra.mxu0 %v140
    %169 = vmatprep.subr.mxu0 0.0
    %170 = vmatpush1.msra.mxu0 %v141
    %171 = vmatprep.subr.mxu0 0.0
    %172 = vmatpush1.msra.mxu0 %v142
    %173 = vmatprep.subr.mxu0 0.0
    %174 = vmatpush1.msra.mxu0 %v143
    %175 = vmatprep.subr.mxu0 0.0
    %176 = vmatpush1.msra.mxu0 %v144
    %177 = vmatprep.subr.mxu0 0.0
    %178 = vmatpush1.msra.mxu0 0.0
    %179 = vmatprep.subr.mxu0 0.0
    %180 = vmatpush1.msra.mxu0 0.0
    %181 = vmatprep.subr.mxu0 0.0
    %182 = vmatpush1.msra.mxu0 0.0
    %183 = vmatprep.subr.mxu0 0.0
    %184 = vmatpush1.msra.mxu0 0.0
    %185 = vmatprep.subr.mxu0 0.0
    %186 = vmatpush1.msra.mxu0 0.0
    %187 = vmatprep.subr.mxu0 0.0
    %188 = vmatpush1.msra.mxu0 0.0
    %189 = vmatprep.subr.mxu0 0.0
    %190 = vmatpush1.msra.mxu0 0.0
    %191 = vmatprep.subr.mxu0 0.0
    %192 = vmatpush1.msra.mxu0 0.0
    %193 = vmatprep.subr.mxu0 0.0
    %194 = vmatpush1.msra.mxu0 0.0
    %195 = vmatprep.subr.mxu0 0.0
    %196 = vmatpush1.msra.mxu0 0.0
    %197 = vmatprep.subr.mxu0 0.0
    %198 = vmatpush1.msra.mxu0 0.0
    %199 = vmatprep.subr.mxu0 0.0
    %200 = vmatpush1.msra.mxu0 0.0
    %201 = vmatprep.subr.mxu0 0.0
    %202 = vmatpush1.msra.mxu0 0.0
    %203 = vmatprep.subr.mxu0 0.0
    %204 = vmatpush1.msra.mxu0 0.0
    %205 = vmatprep.subr.mxu0 0.0
    %206 = vmatpush1.msra.mxu0 0.0
    %207 = vmatprep.subr.mxu0 0.0
    %208 = vmatpush1.msra.mxu0 0.0
    %209 = vmatprep.mubr.f32.mxu0 0.0
    %210 = vmatmul.mubr.f32.gmra.mrb[0].mxu0 %v128
    %v211 = vpop.f32.mrb[0].mxu0
    %v212 = vadd.f32 %v125, %v211
    %v213 = vpop.f32.mrb[0].mxu0
    %214 = vdwg.mxu0
    %v215 = vtanh.pop %v212
    %216 = vst [vmem:[#allocation5] sm:$0xff] %v128
    %217 = vst [vmem:[#allocation6] sm:$0xff] %v215
    // Predicated region
    $region22: #{rnn_simple_forward.1} parent=1 // pred_check
      _
    $region23: #{rnn_simple_forward.1} parent=1 // pred_check_branch
      %219 = sbr.rel (0) target = $region25
    $region24: #{rnn_simple_forward.1} parent=1 // pred_region
      %s221 = ssub.s32 128, 128
      %222 = vsyncadd [#allocation4], %s221
      %s224 = sshll.u32 [#allocation5], 4
      %s225 = int_to_ptr.vmem [resolvable:$true] %s224
      %227 = dma.vmem_to_hbm [thread:$0]  %s225, 128, %s4, [#allocation4]
    $region25: #{rnn_simple_forward.1} parent=1 // pred_fallthru
      _
    // Predicated region
    $region26: #{rnn_simple_forward.1} parent=1 // pred_check
      _
    $region27: #{rnn_simple_forward.1} parent=1 // pred_check_branch
      %229 = sbr.rel (0) target = $region29
    $region28: #{rnn_simple_forward.1} parent=1 // pred_region
      %s231 = ssub.s32 128, 128
      %232 = vsyncadd [#allocation7], %s231
      %s234 = sshll.u32 [#allocation6], 4
      %s235 = int_to_ptr.vmem [resolvable:$true] %s234
      %237 = dma.vmem_to_hbm [thread:$0]  %s235, 128, %s5, [#allocation7]
    $region29: #{rnn_simple_forward.1} parent=1 // pred_fallthru
      _
    // Predicated region
    $region30: #{rnn_simple_forward.1} parent=1 // pred_check
      _
    $region31: #{rnn_simple_forward.1} parent=1 // pred_check_branch
      %239 = sbr.rel (0) target = $region33
    $region32: #{rnn_simple_forward.1} parent=1 // pred_region
      %240 = dma.done [#allocation4], 128
    $region33: #{rnn_simple_forward.1} parent=1 // pred_fallthru
      _
    // Predicated region
    $region34: #{rnn_simple_forward.1} parent=1 // pred_check
      _
    $region35: #{rnn_simple_forward.1} parent=1 // pred_check_branch
      %242 = sbr.rel (0) target = $region37
    $region36: #{rnn_simple_forward.1} parent=1 // pred_region
      %243 = dma.done [#allocation7], 128
    $region37: #{rnn_simple_forward.1} parent=1 // pred_fallthru
      _
    %244 = vsyncpa [#allocation3], 1
    %245 = vsyncpa [#allocation4], 1
    %246 = vsyncpa [#allocation7], 1

</llo_original>
